<compile_context>
chip_gen: v7x
topology: tpu7x:2x2x1
jax: 0.10.0
libtpu: 0.0.40
codegen_flags: <defaults>
</compile_context>

<pallas_src>
from functools import lru_cache, partial

import jax
import jax.numpy as jnp
from jax.experimental import pallas as pl
from jax.experimental.pallas import tpu as pltpu


def _round_up(x, m):
    return (x + m - 1) // m * m


@lru_cache(maxsize=None)
def _prefer_wide_tiles():
    """True on 256-lane-MXU generations (v6e/v7x); False on <= v5 (128-lane)."""
    try:
        kind = jax.devices()[0].device_kind.lower()
    except Exception:
        return True
    for old in ("v2", "v3", "v4", "v5"):
        if old in kind:
            return False
    return True


def _pick_tile(total):
    """`total` is a multiple of 128; pick a lane-dense column tile width.

    On v6e/v7x (256-wide MXU) prefer >=256-lane tiles and pad the total width
    UP to a multiple of the tile, minimizing padding (ties -> bigger tile, i.e.
    fewer ~0.35us grid steps).  On 128-wide-MXU chips keep the zero-padding
    128-multiple divisor choice.
    """
    if total <= 256:
        return total
    if _prefer_wide_tiles():
        best = None
        for t in (512, 384, 256):
            padded = _round_up(total, t)
            if (best is None or padded < best[0]
                    or (padded == best[0] and t > best[1])):
                best = (padded, t)
        return best[1]
    for t in (512, 384, 256, 128):
        if total % t == 0:
            return t
    return 128


@lru_cache(maxsize=None)
def _compiler_params():
    """Generation-aware compiler params (vmem limit per chip generation)."""
    cap = None
    try:
        info = pltpu.get_tpu_info()
        cap = getattr(info, "vmem_capacity_bytes", None)
    except Exception:
        cap = None
    if not cap:
        cap = 128 * 1024 * 1024
    if cap >= 100 * 1024 * 1024:          # v5e / v6e: 128 MiB physical VMEM
        limit = 96 * 1024 * 1024
    else:                                  # v7x: 64 MiB physical per TC
        limit = min(48 * 1024 * 1024,
                    max(cap - 16 * 1024 * 1024, 32 * 1024 * 1024))
    return pltpu.CompilerParams(
        dimension_semantics=("parallel", "arbitrary"),
        vmem_limit_bytes=limit,
    )


# ----------------------------- Pallas kernels ------------------------------ #

def _compute_hidden(x_ref, w1_ref, b1_ref, w2_ref, b2_ref, h_scr):
    """h = relu(x@w1+b1); h = h + relu(h@w2+b2); cache h as bf16 in VMEM.

    Precision contract: the small (C, H) matmul stays f32 (matches the torch
    f32 Translator more closely); the large (H, H) matmul streams bf16
    operands with f32 MXU accumulation.
    """
    h = jnp.dot(x_ref[...], w1_ref[...],
                preferred_element_type=jnp.float32) + b1_ref[...]
    h = jnp.maximum(h, 0.0)
    h2 = jnp.dot(h.astype(jnp.bfloat16), w2_ref[...],
                 preferred_element_type=jnp.float32) + b2_ref[...]
    h = h + jnp.maximum(h2, 0.0)
    h_scr[...] = h.astype(jnp.bfloat16)


def _translator_kernel(x_ref, w1_ref, b1_ref, w2_ref, b2_ref,
                       wz_ref, bz_ref, z_ref, h_scr):
    """Fused Translator forward (with_gmm=False, z_thresh=None).

    grid = (batch_tile, z_column_tile). h is computed once per batch tile and
    cached (bf16) in VMEM scratch; each grid step emits one lane-dense z tile.
    """
    n = pl.program_id(1)

    @pl.when(n == 0)
    def _():
        _compute_hidden(x_ref, w1_ref, b1_ref, w2_ref, b2_ref, h_scr)

    z_ref[...] = (jnp.dot(h_scr[...], wz_ref[...],
                          preferred_element_type=jnp.float32) + bz_ref[...])


def _translator_gmm_nosample_kernel(x_ref, w1_ref, b1_ref, w2_ref, b2_ref,
                                    wh_ref, bh_ref, head_ref, h_scr):
    """GMM no_sample path: emit the fused [z-means | logits] head only.

    No argmax/select epilogue and no zsel output (dead work on this path);
    each grid step streams one lane-dense column tile straight to HBM.
    """
    n = pl.program_id(1)

    @pl.when(n == 0)
    def _():
        _compute_hidden(x_ref, w1_ref, b1_ref, w2_ref, b2_ref, h_scr)

    head_ref[...] = (jnp.dot(h_scr[...], wh_ref[...],
                             preferred_element_type=jnp.float32) + bh_ref[...])


def _translator_gmm_det_kernel(x_ref, w1_ref, b1_ref, w2_ref, b2_ref,
                               wh_ref, bh_ref, logits_ref, zsel_ref,
                               h_scr, head_scr,
                               *, tn, zd_pad, num_mixtures, logits_off,
                               logits_pad):
    """GMM deterministic path (torch: argmax mixture component, gather means).

    The fused head (z means of every component, padded to 128-lane slots, plus
    a 128-lane logits block whose padded lanes carry a -1e30 f32 bias) stays in
    VMEM scratch across the column-tile axis; only the logits block and the
    selected z are written back to HBM.
    """
    n = pl.program_id(1)

    @pl.when(n == 0)
    def _():
        _compute_hidden(x_ref, w1_ref, b1_ref, w2_ref, b2_ref, h_scr)

    tile = (jnp.dot(h_scr[...], wh_ref[...],
                    preferred_element_type=jnp.float32) + bh_ref[...])
    col0 = pl.multiple_of(n * tn, tn)
    head_scr[:, pl.ds(col0, tn)] = tile

    @pl.when(n == pl.num_programs(1) - 1)
    def _():
        logits = head_scr[:, logits_off:logits_off + logits_pad]   # f32
        logits_ref[...] = logits
        row_max = jnp.max(logits, axis=-1, keepdims=True)
        lane = jax.lax.broadcasted_iota(jnp.int32, logits.shape, 1)
        big = jnp.int32(1 << 30)
        # First lane attaining the row max (matches jnp/torch argmax). Padded
        # logit lanes carry an f32 -1e30 bias so they can never tie the max.
        idx = jnp.min(jnp.where(logits == row_max, lane, big),
                      axis=-1, keepdims=True)
        zsel = head_scr[:, 0:zd_pad]
        for m in range(1, num_mixtures):
            comp = head_scr[:, m * zd_pad:(m + 1) * zd_pad]
            zsel = jnp.where(idx == m, comp, zsel)
        zsel_ref[...] = zsel


# --------------------------- weight pre-packing ---------------------------- #

def pack_translator_params(params, *, with_gmm=False, num_mixtures=None,
                           z_dim=None):
    """One-time cast / pad / fuse of the Translator weights (outside the hot
    per-call wrapper, so the (H,H) / (H,P) pad+cast HBM traffic is paid once).
    """
    C, H = params["w1"].shape
    packed = {
        "clip_dim": int(C),
        "hidden": int(H),
        "with_gmm": bool(with_gmm),
        "w1": jnp.asarray(params["w1"], jnp.float32),
        "b1": jnp.asarray(params["b1"], jnp.float32),
        "w2": jnp.asarray(params["w2"], jnp.bfloat16),
        "b2": jnp.asarray(params["b2"], jnp.float32),
    }

    if not with_gmm:
        Z = params["wz"].shape[1]
        tn = _pick_tile(_round_up(Z, 128))
        Zp = _round_up(Z, tn)
        packed["wz"] = jnp.pad(jnp.asarray(params["wz"], jnp.bfloat16),
                               ((0, 0), (0, Zp - Z)))
        packed["bz"] = jnp.pad(jnp.asarray(params["bz"], jnp.float32),
                               ((0, 0), (0, Zp - Z)))
        packed.update(z_dim=int(Z), tn=int(tn), zp=int(Zp))
        return packed

    assert num_mixtures is not None and z_dim is not None
    M, zd = int(num_mixtures), int(z_dim)
    zd_pad = _round_up(zd, 128)
    logits_pad = _round_up(M, 128)
    logits_off = M * zd_pad
    P = logits_off + logits_pad
    tn = _pick_tile(_round_up(P, 128))
    Pp = _round_up(P, tn)

    # fused lane-dense head: [z-head (each component padded to a 128-lane
    # slot) | mixture-logit head (padded to 128 lanes, pad bias = -1e30)]
    wz_blocks = jnp.pad(
        jnp.asarray(params["wz"], jnp.bfloat16).reshape(H, M, zd),
        ((0, 0), (0, 0), (0, zd_pad - zd))).reshape(H, M * zd_pad)
    bz_blocks = jnp.pad(
        jnp.asarray(params["bz"], jnp.float32).reshape(1, M, zd),
        ((0, 0), (0, 0), (0, zd_pad - zd))).reshape(1, M * zd_pad)

    wh = jnp.zeros((H, Pp), jnp.bfloat16)
    wh = wh.at[:, :logits_off].set(wz_blocks)
    wh = wh.at[:, logits_off:logits_off + M].set(
        jnp.asarray(params["wm"], jnp.bfloat16))
    bh = jnp.zeros((1, Pp), jnp.float32)
    bh = bh.at[:, :logits_off].set(bz_blocks)
    bh = bh.at[:, logits_off:logits_off + logits_pad].set(-1e30)  # pad logits
    bh = bh.at[:, logits_off:logits_off + M].set(
        jnp.asarray(params["bm"], jnp.float32))

    packed.update(wh=wh, bh=bh, z_dim=zd, num_mixtures=M, zd_pad=int(zd_pad),
                  logits_off=int(logits_off), logits_pad=int(logits_pad),
                  tn=int(tn), pp=int(Pp))
    return packed


# ------------------------------- wrappers ---------------------------------- #

def _weight_spec(shape, single_buffer):
    """BlockSpec for a grid-invariant weight block.

    With single_buffer=True the block is single-buffered (pl.Buffered(1)):
    its index map never changes, so default double-buffering only doubles
    its VMEM footprint.
    """
    if single_buffer:
        return pl.BlockSpec(shape, lambda bi, n: (0, 0),
                            pipeline_mode=pl.Buffered(1))
    return pl.BlockSpec(shape, lambda bi, n: (0, 0))


def _shared_in_specs(tb, C, H, single_buffer):
    return [
        pl.BlockSpec((tb, C), lambda bi, n: (bi, 0)),   # x (changes with bi)
        _weight_spec((C, H), single_buffer),            # w1
        _weight_spec((1, H), single_buffer),            # b1
        _weight_spec((H, H), single_buffer),            # w2
        _weight_spec((1, H), single_buffer),            # b2
    ]


def _try_single_buffer(build):
    """Prefer single-buffered constant weights; fall back if this jax build
    rejects pipeline_mode=pl.Buffered(1)."""
    try:
        return build(True)
    except Exception:
        return build(False)


def translator_forward(clip_latent, packed, *, no_sample=False):
    """JAX wrapper reproducing Translator.forward (z_thresh=None, as in Model).

    clip_latent : (B, clip_dim) float32
    packed      : output of pack_translator_params()
    """
    B, C = clip_latent.shape
    H = packed["hidden"]
    assert C == packed["clip_dim"]

    # batch padding / tiling: multiple of 8 sublanes; up to 256 rows per tile
    # when B is large (v7x MXU is 2x256x256), otherwise cap at 128.
    cap_tb = 256 if B >= 256 else 128
    tb = min(_round_up(B, 8), cap_tb)
    Bp = _round_up(B, tb)
    x_p = jnp.pad(clip_latent.astype(jnp.float32), ((0, Bp - B), (0, 0)))

    w1, b1, w2, b2 = packed["w1"], packed["b1"], packed["w2"], packed["b2"]

    if not packed["with_gmm"]:
        Z, tn, Zp = packed["z_dim"], packed["tn"], packed["zp"]
        wz, bz = packed["wz"], packed["bz"]

        def build(single_buffer):
            return pl.pallas_call(
                _translator_kernel,
                out_shape=jax.ShapeDtypeStruct((Bp, Zp), jnp.float32),
                grid=(Bp // tb, Zp // tn),
                in_specs=_shared_in_specs(tb, C, H, single_buffer) + [
                    pl.BlockSpec((H, tn), lambda bi, n: (0, n)),
                    pl.BlockSpec((1, tn), lambda bi, n: (0, n)),
                ],
                out_specs=pl.BlockSpec((tb, tn), lambda bi, n: (bi, n)),
                scratch_shapes=[pltpu.VMEM((tb, H), jnp.bfloat16)],
                compiler_params=_compiler_params(),
            )(x_p, w1, b1, w2, b2, wz, bz)

        z_p = _try_single_buffer(build)
        return z_p[:B, :Z]

    M = packed["num_mixtures"]
    zd = packed["z_dim"]
    zd_pad = packed["zd_pad"]
    logits_off = packed["logits_off"]
    logits_pad = packed["logits_pad"]
    tn = packed["tn"]
    Pp = packed["pp"]
    wh, bh = packed["wh"], packed["bh"]

    if no_sample:
        # Only the head (means + logits) is needed: stream it to HBM, no
        # argmax/select epilogue and no zsel output.
        def build(single_buffer):
            return pl.pallas_call(
                _translator_gmm_nosample_kernel,
                out_shape=jax.ShapeDtypeStruct((Bp, Pp), jnp.float32),
                grid=(Bp // tb, Pp // tn),
                in_specs=_shared_in_specs(tb, C, H, single_buffer) + [
                    pl.BlockSpec((H, tn), lambda bi, n: (0, n)),
                    pl.BlockSpec((1, tn), lambda bi, n: (0, n)),
                ],
                out_specs=pl.BlockSpec((tb, tn), lambda bi, n: (bi, n)),
                scratch_shapes=[pltpu.VMEM((tb, H), jnp.bfloat16)],
                compiler_params=_compiler_params(),
            )(x_p, w1, b1, w2, b2, wh, bh)

        head_p = _try_single_buffer(build)
        logits = head_p[:B, logits_off:logits_off + M]
        z_means = head_p[:B, :logits_off].reshape(B, M, zd_pad)[:, :, :zd]
        # TODO(synk): the torch branch also returns z_stds (exp(z_log_stds) +
        # min_std); that is a parameter-only broadcast, omitted here.
        return logits, z_means

    # deterministic branch: argmax mixture component + gather, fused in-kernel;
    # the full head stays in VMEM scratch (no dead HBM writeback).
    kernel = partial(_translator_gmm_det_kernel, tn=tn, zd_pad=zd_pad,
                     num_mixtures=M, logits_off=logits_off,
                     logits_pad=logits_pad)

    def build(single_buffer):
        return pl.pallas_call(
            kernel,
            out_shape=(jax.ShapeDtypeStruct((Bp, logits_pad), jnp.float32),
                       jax.ShapeDtypeStruct((Bp, zd_pad), jnp.float32)),
            grid=(Bp // tb, Pp // tn),
            in_specs=_shared_in_specs(tb, C, H, single_buffer) + [
                pl.BlockSpec((H, tn), lambda bi, n: (0, n)),
                pl.BlockSpec((1, tn), lambda bi, n: (0, n)),
            ],
            out_specs=(pl.BlockSpec((tb, logits_pad), lambda bi, n: (bi, 0)),
                       pl.BlockSpec((tb, zd_pad), lambda bi, n: (bi, 0))),
            scratch_shapes=[pltpu.VMEM((tb, H), jnp.bfloat16),
                            pltpu.VMEM((tb, Pp), jnp.float32)],
            compiler_params=_compiler_params(),
        )(x_p, w1, b1, w2, b2, wh, bh)

    logits_p, zsel_p = _try_single_buffer(build)
    logits = logits_p[:B, :M]
    z = zsel_p[:B, :zd]
    # TODO(synk): the torch branch also builds a MixtureSameFamily distribution
    # object (z_gmm); there is no Pallas equivalent for a distribution object.
    return logits, z


# ------------------------- deterministic parameters ------------------------ #

def init_params(key, clip_dim, z_dim, num_mixtures):
    H = 4 * clip_dim
    ks = jax.random.split(key, 10)
    scale = 0.05

    def lin(k, fan_in, fan_out):
        return scale * jax.random.normal(k, (fan_in, fan_out), jnp.float32)

    return {
        "w1": lin(ks[0], clip_dim, H),
        "b1": scale * jax.random.normal(ks[1], (1, H), jnp.float32),
        "w2": lin(ks[2], H, H),
        "b2": scale * jax.random.normal(ks[3], (1, H), jnp.float32),
        "wz": lin(ks[4], H, z_dim),
        "bz": scale * jax.random.normal(ks[5], (1, z_dim), jnp.float32),
        # GMM heads (independent keys)
        "wm": lin(ks[6], H, num_mixtures),
        "bm": scale * jax.random.normal(ks[7], (1, num_mixtures), jnp.float32),
        "wz_gmm": lin(ks[8], H, num_mixtures * z_dim),
        "bz_gmm": scale * jax.random.normal(ks[9], (1, num_mixtures * z_dim),
                                            jnp.float32),
    }


def translator_ref(x, params, *, gmm=False, num_mixtures=None, z_dim=None,
                   no_sample=False):
    """Pure-JAX reference with the kernel's precision contract:
    f32 first matmul, bf16-operand / f32-accum for the big matmuls."""
    bf = jnp.bfloat16

    def mm(a, w):
        return jnp.dot(a.astype(bf), w.astype(bf),
                       preferred_element_type=jnp.float32)

    h = jax.nn.relu(jnp.dot(x, params["w1"],
                            preferred_element_type=jnp.float32) + params["b1"])
    h = h + jax.nn.relu(mm(h, params["w2"]) + params["b2"])
    if not gmm:
        return mm(h, params["wz"]) + params["bz"]
    z_flat = mm(h, params["wz_gmm"]) + params["bz_gmm"]
    logits = mm(h, params["wm"]) + params["bm"]
    z_means = z_flat.reshape(x.shape[0], num_mixtures, z_dim)
    if no_sample:
        return logits, z_means
    idx = jnp.argmax(logits, axis=1)
    z = jnp.take_along_axis(z_means, idx[:, None, None], axis=1)[:, 0, :]
    return logits, z


# ---------------------------------- main ------------------------------------ #

if __name__ == "__main__":
    key = jax.random.PRNGKey(0)
    B, CLIP_DIM, Z_DIM, NUM_MIX = 8, 32, 64, 4

    k_x, k_p = jax.random.split(key)
    clip_latent = jax.random.normal(k_x, (B, CLIP_DIM), jnp.float32)
    params = init_params(k_p, CLIP_DIM, Z_DIM, NUM_MIX)

    # --- non-GMM path (x_type='clip_latent', return_after_translator=True) ---
    packed = pack_translator_params(params, with_gmm=False)
    z = translator_forward(clip_latent, packed)
    z = jax.block_until_ready(z)
    z_ref = translator_ref(clip_latent, params, gmm=False)
    assert jnp.allclose(z, z_ref, atol=1e-3, rtol=1e-3), "non-GMM mismatch"

    # --- GMM deterministic path (argmax mixture component, fused in-kernel) ---
    gmm_params = dict(params)
    gmm_params["wz"] = params["wz_gmm"]
    gmm_params["bz"] = params["bz_gmm"]
    packed_gmm = pack_translator_params(gmm_params, with_gmm=True,
                                        num_mixtures=NUM_MIX, z_dim=Z_DIM)
    logits, z_g = translator_forward(clip_latent, packed_gmm, no_sample=False)
    z_g = jax.block_until_ready(z_g)
    logits_ref, z_g_ref = translator_ref(clip_latent, params, gmm=True,
                                         num_mixtures=NUM_MIX, z_dim=Z_DIM)
    assert jnp.allclose(logits, logits_ref, atol=1e-3, rtol=1e-3), \
        "logits mismatch"
    assert jnp.allclose(z_g, z_g_ref, atol=1e-3, rtol=1e-3), "GMM z mismatch"

    # --- GMM no_sample path (returns mixture means, no epilogue) ---
    logits_ns, z_means = translator_forward(clip_latent, packed_gmm,
                                            no_sample=True)
    z_means = jax.block_until_ready(z_means)
    _, z_means_ref = translator_ref(clip_latent, params, gmm=True,
                                    num_mixtures=NUM_MIX, z_dim=Z_DIM,
                                    no_sample=True)
    assert jnp.allclose(logits_ns, logits_ref, atol=1e-3, rtol=1e-3), \
        "no_sample logits mismatch"
    assert jnp.allclose(z_means, z_means_ref, atol=1e-3, rtol=1e-3), \
        "z_means mismatch"

    print("KERNEL_OK")
</pallas_src>

<mosaic_0001>
module attributes {stable_mosaic.version = 11 : i64} {
  func.func @_translator_kernel(%arg0: i32, %arg1: i32, %arg2: memref<8x32xf32, #tpu.memory_space<vmem>>, %arg3: memref<32x128xf32, #tpu.memory_space<vmem>>, %arg4: memref<1x128xf32, #tpu.memory_space<vmem>>, %arg5: memref<128x128xbf16, #tpu.memory_space<vmem>>, %arg6: memref<1x128xf32, #tpu.memory_space<vmem>>, %arg7: memref<128x128xbf16, #tpu.memory_space<vmem>>, %arg8: memref<1x128xf32, #tpu.memory_space<vmem>>, %arg9: memref<8x128xf32, #tpu.memory_space<vmem>>, %arg10: memref<8x128xbf16, #tpu.memory_space<vmem>>) attributes {dimension_semantics = [#tpu.dimension_semantics<parallel>, #tpu.dimension_semantics<arbitrary>], iteration_bounds = array<i64: 1, 1>, scalar_prefetch = 0 : i64, scratch_operands = 1 : i64, tpu.core_type = #tpu.core_type<tc>, window_params = [{transform_indices = @transform_0, window_bounds = array<i64: 8, 32>}, {pipeline_mode = #tpu.pipeline_mode<synchronous>, transform_indices = @transform_1, window_bounds = array<i64: 32, 128>}, {pipeline_mode = #tpu.pipeline_mode<synchronous>, transform_indices = @transform_2, window_bounds = array<i64: 1, 128>}, {pipeline_mode = #tpu.pipeline_mode<synchronous>, transform_indices = @transform_3, window_bounds = array<i64: 128, 128>}, {pipeline_mode = #tpu.pipeline_mode<synchronous>, transform_indices = @transform_4, window_bounds = array<i64: 1, 128>}, {transform_indices = @transform_5, window_bounds = array<i64: 128, 128>}, {transform_indices = @transform_6, window_bounds = array<i64: 1, 128>}, {transform_indices = @transform_7, window_bounds = array<i64: 8, 128>}]} {
    %c0_i32 = arith.constant 0 : i32
    %0 = arith.cmpi eq, %arg1, %c0_i32 : i32
    %1 = arith.extui %0 : i1 to i32
    %c0_i32_0 = arith.constant 0 : i32
    %2 = arith.cmpi ne, %1, %c0_i32_0 : i32
    scf.if %2 {
      %c0_8 = arith.constant 0 : index
      %c0_9 = arith.constant 0 : index
      %10 = vector.load %arg2[%c0_8, %c0_9] : memref<8x32xf32, #tpu.memory_space<vmem>>, vector<8x32xf32>
      %c0_10 = arith.constant 0 : index
      %c0_11 = arith.constant 0 : index
      %11 = vector.load %arg3[%c0_10, %c0_11] : memref<32x128xf32, #tpu.memory_space<vmem>>, vector<32x128xf32>
      %cst_12 = arith.constant dense<0.000000e+00> : vector<8x128xf32>
      %12 = tpu.matmul %10, %11, %cst_12 {dimension_numbers = #tpu.dot_dimension_numbers<[1], [0], [0], [1], [0, 0, 1, 1], [], []>} : vector<8x32xf32>, vector<32x128xf32>, vector<8x128xf32> -> vector<8x128xf32>
      %c0_13 = arith.constant 0 : index
      %c0_14 = arith.constant 0 : index
      %13 = vector.load %arg4[%c0_13, %c0_14] : memref<1x128xf32, #tpu.memory_space<vmem>>, vector<1x128xf32>
      %14 = vector.broadcast %13 : vector<1x128xf32> to vector<8x128xf32>
      %15 = arith.addf %12, %14 : vector<8x128xf32>
      %cst_15 = arith.constant 0.000000e+00 : f32
      %16 = vector.broadcast %cst_15 : f32 to vector<8x128xf32>
      %17 = arith.maximumf %15, %16 : vector<8x128xf32>
      %18 = arith.truncf %17 : vector<8x128xf32> to vector<8x128xbf16>
      %c0_16 = arith.constant 0 : index
      %c0_17 = arith.constant 0 : index
      %19 = vector.load %arg5[%c0_16, %c0_17] : memref<128x128xbf16, #tpu.memory_space<vmem>>, vector<128x128xbf16>
      %cst_18 = arith.constant dense<0.000000e+00> : vector<8x128xf32>
      %20 = tpu.matmul %18, %19, %cst_18 {dimension_numbers = #tpu.dot_dimension_numbers<[1], [0], [0], [1], [0, 0, 1, 1], [], []>} : vector<8x128xbf16>, vector<128x128xbf16>, vector<8x128xf32> -> vector<8x128xf32>
      %c0_19 = arith.constant 0 : index
      %c0_20 = arith.constant 0 : index
      %21 = vector.load %arg6[%c0_19, %c0_20] : memref<1x128xf32, #tpu.memory_space<vmem>>, vector<1x128xf32>
      %22 = vector.broadcast %21 : vector<1x128xf32> to vector<8x128xf32>
      %23 = arith.addf %20, %22 : vector<8x128xf32>
      %cst_21 = arith.constant 0.000000e+00 : f32
      %24 = vector.broadcast %cst_21 : f32 to vector<8x128xf32>
      %25 = arith.maximumf %23, %24 : vector<8x128xf32>
      %26 = arith.addf %17, %25 : vector<8x128xf32>
      %27 = arith.truncf %26 : vector<8x128xf32> to vector<8x128xbf16>
      %c0_22 = arith.constant 0 : index
      %c0_23 = arith.constant 0 : index
      %28 = vector.load %arg10[%c0_22, %c0_23] : memref<8x128xbf16, #tpu.memory_space<vmem>>, vector<8x128xbf16>
      tpu.vector_store %arg10[%c0_22, %c0_23], %27 {strides = array<i32>} : memref<8x128xbf16, #tpu.memory_space<vmem>>, vector<8x128xbf16>,
    } else {
    }
    %c0 = arith.constant 0 : index
    %c0_1 = arith.constant 0 : index
    %3 = vector.load %arg10[%c0, %c0_1] : memref<8x128xbf16, #tpu.memory_space<vmem>>, vector<8x128xbf16>
    %c0_2 = arith.constant 0 : index
    %c0_3 = arith.constant 0 : index
    %4 = vector.load %arg7[%c0_2, %c0_3] : memref<128x128xbf16, #tpu.memory_space<vmem>>, vector<128x128xbf16>
    %cst = arith.constant dense<0.000000e+00> : vector<8x128xf32>
    %5 = tpu.matmul %3, %4, %cst {dimension_numbers = #tpu.dot_dimension_numbers<[1], [0], [0], [1], [0, 0, 1, 1], [], []>} : vector<8x128xbf16>, vector<128x128xbf16>, vector<8x128xf32> -> vector<8x128xf32>
    %c0_4 = arith.constant 0 : index
    %c0_5 = arith.constant 0 : index
    %6 = vector.load %arg8[%c0_4, %c0_5] : memref<1x128xf32, #tpu.memory_space<vmem>>, vector<1x128xf32>
    %7 = vector.broadcast %6 : vector<1x128xf32> to vector<8x128xf32>
    %8 = arith.addf %5, %7 : vector<8x128xf32>
    %c0_6 = arith.constant 0 : index
    %c0_7 = arith.constant 0 : index
    %9 = vector.load %arg9[%c0_6, %c0_7] : memref<8x128xf32, #tpu.memory_space<vmem>>, vector<8x128xf32>
    tpu.vector_store %arg9[%c0_6, %c0_7], %8 {strides = array<i32>} : memref<8x128xf32, #tpu.memory_space<vmem>>, vector<8x128xf32>,
    return
  }
  func.func @transform_0(%arg0: i32, %arg1: i32) -> (i32, i32) {
    %c0_i32 = arith.constant 0 : i32
    %c0_i32_0 = arith.constant 0 : i32
    return %arg0, %c0_i32 : i32, i32
  }
  func.func @transform_1(%arg0: i32, %arg1: i32) -> (i32, i32) {
    %c0_i32 = arith.constant 0 : i32
    %c0_i32_0 = arith.constant 0 : i32
    %c0_i32_1 = arith.constant 0 : i32
    return %c0_i32, %c0_i32_0 : i32, i32
  }
  func.func @transform_2(%arg0: i32, %arg1: i32) -> (i32, i32) {
    %c0_i32 = arith.constant 0 : i32
    %c0_i32_0 = arith.constant 0 : i32
    %c0_i32_1 = arith.constant 0 : i32
    return %c0_i32, %c0_i32_0 : i32, i32
  }
  func.func @transform_3(%arg0: i32, %arg1: i32) -> (i32, i32) {
    %c0_i32 = arith.constant 0 : i32
    %c0_i32_0 = arith.constant 0 : i32
    %c0_i32_1 = arith.constant 0 : i32
    return %c0_i32, %c0_i32_0 : i32, i32
  }
  func.func @transform_4(%arg0: i32, %arg1: i32) -> (i32, i32) {
    %c0_i32 = arith.constant 0 : i32
    %c0_i32_0 = arith.constant 0 : i32
    %c0_i32_1 = arith.constant 0 : i32
    return %c0_i32, %c0_i32_0 : i32, i32
  }
  func.func @transform_5(%arg0: i32, %arg1: i32) -> (i32, i32) {
    %c0_i32 = arith.constant 0 : i32
    %c0_i32_0 = arith.constant 0 : i32
    return %c0_i32, %arg1 : i32, i32
  }
  func.func @transform_6(%arg0: i32, %arg1: i32) -> (i32, i32) {
    %c0_i32 = arith.constant 0 : i32
    %c0_i32_0 = arith.constant 0 : i32
    return %c0_i32, %arg1 : i32, i32
  }
  func.func @transform_7(%arg0: i32, %arg1: i32) -> (i32, i32) {
    %c0_i32 = arith.constant 0 : i32
    return %arg0, %arg1 : i32, i32
  }
}

module attributes {stable_mosaic.version = 11 : i64} {
  func.func @_translator_kernel(%arg0: i32, %arg1: i32, %arg2: memref<8x32xf32, #tpu.memory_space<vmem>>, %arg3: memref<32x128xf32, #tpu.memory_space<vmem>>, %arg4: memref<1x128xf32, #tpu.memory_space<vmem>>, %arg5: memref<128x128xbf16, #tpu.memory_space<vmem>>, %arg6: memref<1x128xf32, #tpu.memory_space<vmem>>, %arg7: memref<128x128xbf16, #tpu.memory_space<vmem>>, %arg8: memref<1x128xf32, #tpu.memory_space<vmem>>, %arg9: memref<8x128xf32, #tpu.memory_space<vmem>>, %arg10: memref<8x128xbf16, #tpu.memory_space<vmem>>) attributes {dimension_semantics = [#tpu.dimension_semantics<parallel>, #tpu.dimension_semantics<arbitrary>], iteration_bounds = array<i64: 1, 1>, scalar_prefetch = 0 : i64, scratch_operands = 1 : i64, tpu.core_type = #tpu.core_type<tc>, window_params = [{transform_indices = @transform_0, window_bounds = array<i64: 8, 32>}, {pipeline_mode = #tpu.pipeline_mode<synchronous>, transform_indices = @transform_1, window_bounds = array<i64: 32, 128>}, {pipeline_mode = #tpu.pipeline_mode<synchronous>, transform_indices = @transform_2, window_bounds = array<i64: 1, 128>}, {pipeline_mode = #tpu.pipeline_mode<synchronous>, transform_indices = @transform_3, window_bounds = array<i64: 128, 128>}, {pipeline_mode = #tpu.pipeline_mode<synchronous>, transform_indices = @transform_4, window_bounds = array<i64: 1, 128>}, {transform_indices = @transform_5, window_bounds = array<i64: 128, 128>}, {transform_indices = @transform_6, window_bounds = array<i64: 1, 128>}, {transform_indices = @transform_7, window_bounds = array<i64: 8, 128>}]} {
    %c0_i32 = arith.constant 0 : i32
    %0 = arith.cmpi eq, %arg1, %c0_i32 : i32
    %1 = arith.extui %0 : i1 to i32
    %c0_i32_0 = arith.constant 0 : i32
    %2 = arith.cmpi ne, %1, %c0_i32_0 : i32
    scf.if %2 {
      %c0_8 = arith.constant 0 : index
      %c0_9 = arith.constant 0 : index
      %10 = vector.load %arg2[%c0_8, %c0_9] : memref<8x32xf32, #tpu.memory_space<vmem>>, vector<8x32xf32>
      %c0_10 = arith.constant 0 : index
      %c0_11 = arith.constant 0 : index
      %11 = vector.load %arg3[%c0_10, %c0_11] : memref<32x128xf32, #tpu.memory_space<vmem>>, vector<32x128xf32>
      %cst_12 = arith.constant dense<0.000000e+00> : vector<8x128xf32>
      %12 = tpu.matmul %10, %11, %cst_12 {dimension_numbers = #tpu.dot_dimension_numbers<[1], [0], [0], [1], [0, 0, 1, 1], [], []>} : vector<8x32xf32>, vector<32x128xf32>, vector<8x128xf32> -> vector<8x128xf32>
      %c0_13 = arith.constant 0 : index
      %c0_14 = arith.constant 0 : index
      %13 = vector.load %arg4[%c0_13, %c0_14] : memref<1x128xf32, #tpu.memory_space<vmem>>, vector<1x128xf32>
      %14 = vector.broadcast %13 : vector<1x128xf32> to vector<8x128xf32>
      %15 = arith.addf %12, %14 : vector<8x128xf32>
      %cst_15 = arith.constant 0.000000e+00 : f32
      %16 = vector.broadcast %cst_15 : f32 to vector<8x128xf32>
      %17 = arith.maximumf %15, %16 : vector<8x128xf32>
      %18 = arith.truncf %17 : vector<8x128xf32> to vector<8x128xbf16>
      %c0_16 = arith.constant 0 : index
      %c0_17 = arith.constant 0 : index
      %19 = vector.load %arg5[%c0_16, %c0_17] : memref<128x128xbf16, #tpu.memory_space<vmem>>, vector<128x128xbf16>
      %cst_18 = arith.constant dense<0.000000e+00> : vector<8x128xf32>
      %20 = tpu.matmul %18, %19, %cst_18 {dimension_numbers = #tpu.dot_dimension_numbers<[1], [0], [0], [1], [0, 0, 1, 1], [], []>} : vector<8x128xbf16>, vector<128x128xbf16>, vector<8x128xf32> -> vector<8x128xf32>
      %c0_19 = arith.constant 0 : index
      %c0_20 = arith.constant 0 : index
      %21 = vector.load %arg6[%c0_19, %c0_20] : memref<1x128xf32, #tpu.memory_space<vmem>>, vector<1x128xf32>
      %22 = vector.broadcast %21 : vector<1x128xf32> to vector<8x128xf32>
      %23 = arith.addf %20, %22 : vector<8x128xf32>
      %cst_21 = arith.constant 0.000000e+00 : f32
      %24 = vector.broadcast %cst_21 : f32 to vector<8x128xf32>
      %25 = arith.maximumf %23, %24 : vector<8x128xf32>
      %26 = arith.addf %17, %25 : vector<8x128xf32>
      %27 = arith.truncf %26 : vector<8x128xf32> to vector<8x128xbf16>
      %c0_22 = arith.constant 0 : index
      %c0_23 = arith.constant 0 : index
      %28 = vector.load %arg10[%c0_22, %c0_23] : memref<8x128xbf16, #tpu.memory_space<vmem>>, vector<8x128xbf16>
      tpu.vector_store %arg10[%c0_22, %c0_23], %27 {strides = array<i32>} : memref<8x128xbf16, #tpu.memory_space<vmem>>, vector<8x128xbf16>,
    } else {
    }
    %c0 = arith.constant 0 : index
    %c0_1 = arith.constant 0 : index
    %3 = vector.load %arg10[%c0, %c0_1] : memref<8x128xbf16, #tpu.memory_space<vmem>>, vector<8x128xbf16>
    %c0_2 = arith.constant 0 : index
    %c0_3 = arith.constant 0 : index
    %4 = vector.load %arg7[%c0_2, %c0_3] : memref<128x128xbf16, #tpu.memory_space<vmem>>, vector<128x128xbf16>
    %cst = arith.constant dense<0.000000e+00> : vector<8x128xf32>
    %5 = tpu.matmul %3, %4, %cst {dimension_numbers = #tpu.dot_dimension_numbers<[1], [0], [0], [1], [0, 0, 1, 1], [], []>} : vector<8x128xbf16>, vector<128x128xbf16>, vector<8x128xf32> -> vector<8x128xf32>
    %c0_4 = arith.constant 0 : index
    %c0_5 = arith.constant 0 : index
    %6 = vector.load %arg8[%c0_4, %c0_5] : memref<1x128xf32, #tpu.memory_space<vmem>>, vector<1x128xf32>
    %7 = vector.broadcast %6 : vector<1x128xf32> to vector<8x128xf32>
    %8 = arith.addf %5, %7 : vector<8x128xf32>
    %c0_6 = arith.constant 0 : index
    %c0_7 = arith.constant 0 : index
    %9 = vector.load %arg9[%c0_6, %c0_7] : memref<8x128xf32, #tpu.memory_space<vmem>>, vector<8x128xf32>
    tpu.vector_store %arg9[%c0_6, %c0_7], %8 {strides = array<i32>} : memref<8x128xf32, #tpu.memory_space<vmem>>, vector<8x128xf32>,
    return
  }
  func.func @transform_0(%arg0: i32, %arg1: i32) -> (i32, i32) {
    %c0_i32 = arith.constant 0 : i32
    %c0_i32_0 = arith.constant 0 : i32
    return %arg0, %c0_i32 : i32, i32
  }
  func.func @transform_1(%arg0: i32, %arg1: i32) -> (i32, i32) {
    %c0_i32 = arith.constant 0 : i32
    %c0_i32_0 = arith.constant 0 : i32
    %c0_i32_1 = arith.constant 0 : i32
    return %c0_i32, %c0_i32_0 : i32, i32
  }
  func.func @transform_2(%arg0: i32, %arg1: i32) -> (i32, i32) {
    %c0_i32 = arith.constant 0 : i32
    %c0_i32_0 = arith.constant 0 : i32
    %c0_i32_1 = arith.constant 0 : i32
    return %c0_i32, %c0_i32_0 : i32, i32
  }
  func.func @transform_3(%arg0: i32, %arg1: i32) -> (i32, i32) {
    %c0_i32 = arith.constant 0 : i32
    %c0_i32_0 = arith.constant 0 : i32
    %c0_i32_1 = arith.constant 0 : i32
    return %c0_i32, %c0_i32_0 : i32, i32
  }
  func.func @transform_4(%arg0: i32, %arg1: i32) -> (i32, i32) {
    %c0_i32 = arith.constant 0 : i32
    %c0_i32_0 = arith.constant 0 : i32
    %c0_i32_1 = arith.constant 0 : i32
    return %c0_i32, %c0_i32_0 : i32, i32
  }
  func.func @transform_5(%arg0: i32, %arg1: i32) -> (i32, i32) {
    %c0_i32 = arith.constant 0 : i32
    %c0_i32_0 = arith.constant 0 : i32
    return %c0_i32, %arg1 : i32, i32
  }
  func.func @transform_6(%arg0: i32, %arg1: i32) -> (i32, i32) {
    %c0_i32 = arith.constant 0 : i32
    %c0_i32_0 = arith.constant 0 : i32
    return %c0_i32, %arg1 : i32, i32
  }
  func.func @transform_7(%arg0: i32, %arg1: i32) -> (i32, i32) {
    %c0_i32 = arith.constant 0 : i32
    return %arg0, %arg1 : i32, i32
  }
}

</mosaic_0001>

<llo_original>
// kernel: tpu_custom_call.1
$region0: #{tpu_custom_call.1}
  #allocation0 [shape = 'u32[]', space=smem, size = 0x4, offset = 0x4, fixed_abs, tag = 'smem constant byte address 0x4 - core index']
  #allocation1 [shape = 'u32[144,128]{1,0:T(1,128)}', space=vmem, size = 0x12000, scoped, tag = 'internal scratch']
  #allocation2 [shape = 'bf16[8,128]{1,0:T(8,128)(2,1)}', space=vmem, size = 0x800, scoped, tag = 'scratch operand']
  %s0 = inlined_call_operand.hbm [shape: f32[8,32], index: 0, kind: input, shape index: {}]
  %s1 = inlined_call_operand.hbm [shape: f32[32,128], index: 1, kind: input, shape index: {}]
  %s2 = inlined_call_operand.hbm [shape: f32[1,128], index: 2, kind: input, shape index: {}]
  %s3 = inlined_call_operand.hbm [shape: bf16[128,128], index: 3, kind: input, shape index: {}]
  %s4 = inlined_call_operand.hbm [shape: f32[1,128], index: 4, kind: input, shape index: {}]
  %s5 = inlined_call_operand.hbm [shape: bf16[128,128], index: 5, kind: input, shape index: {}]
  %s6 = inlined_call_operand.hbm [shape: f32[1,128], index: 6, kind: input, shape index: {}]
  %s7 = inlined_call_operand.hbm [shape: f32[8,128], index: 7, kind: output, shape index: {}]
  %s8 = sld [smem:[#allocation0]]
  $region70: #{tpu_custom_call.1} parent=0
    _
  %s10 = ssub.s32 1, %s8
  %s11 = scalar_select 0, %s10, %s8
  $region1: #{tpu_custom_call.1} parent=0
    #allocation3 [shape = 'u8[4096]{0}', space=vmem, size = 0x1000, scoped, tag = 'input window, operand 0, single buffered']
    #allocation4 [shape = 's32[1]{0}', space=sflag, size = 0x4, scoped, tag = 'scoped memory for tpu_custom_call.1']
    #allocation5 [shape = 's32[1]{0}', space=sflag, size = 0x4, scoped, tag = 'scoped memory for tpu_custom_call.1']
    #allocation6 [shape = 'u8[16384]{0}', space=vmem, size = 0x4000, scoped, tag = 'input window, operand 1, single buffered']
    #allocation7 [shape = 's32[1]{0}', space=sflag, size = 0x4, scoped, tag = 'scoped memory for tpu_custom_call.1']
    #allocation8 [shape = 'u8[512]{0}', space=vmem, size = 0x400, scoped, tag = 'input window, operand 2, single buffered']
    #allocation9 [shape = 'u8[32768]{0}', space=vmem, size = 0x8000, scoped, tag = 'input window, operand 3, single buffered']
    #allocation10 [shape = 's32[1]{0}', space=sflag, size = 0x4, scoped, tag = 'scoped memory for tpu_custom_call.1']
    #allocation11 [shape = 'u8[512]{0}', space=vmem, size = 0x400, scoped, tag = 'input window, operand 4, single buffered']
    #allocation12 [shape = 'u8[32768]{0}', space=vmem, size = 0x8000, scoped, tag = 'input window, operand 5, single buffered']
    #allocation13 [shape = 's32[1]{0}', space=sflag, size = 0x4, scoped, tag = 'scoped memory for tpu_custom_call.1']
    #allocation14 [shape = 'u8[512]{0}', space=vmem, size = 0x400, scoped, tag = 'input window, operand 6, single buffered']
    #allocation15 [shape = 'u8[4096]{0}', space=vmem, size = 0x1000, scoped, tag = 'output window, operand 0, single buffered']
    %12 = vsyncpa [#allocation4], 0
    %13 = vsyncpa [#allocation7], 0
    %14 = vsyncpa [#allocation10], 0
    %15 = vsyncpa [#allocation13], 0
    %16 = vsyncpa [#allocation5], 0
    // Predicated region
    $region2: #{tpu_custom_call.1} parent=1 // pred_check
      _
    $region3: #{tpu_custom_call.1} parent=1 // pred_check_branch
      %18 = sbr.rel (0) target = $region5
    $region4: #{tpu_custom_call.1} parent=1 // pred_region
      %s20 = ssub.s32 128, 128
      %21 = vsyncadd [#allocation4], %s20
      %s23 = sshll.u32 [#allocation3], 4
      %s24 = int_to_ptr.vmem [resolvable:$true] %s23
      %26 = dma.hbm_to_vmem [thread:$0]  %s0, 128, %s24, [#allocation4]
    $region5: #{tpu_custom_call.1} parent=1 // pred_fallthru
      _
    // Predicated region
    $region6: #{tpu_custom_call.1} parent=1 // pred_check
      _
    $region7: #{tpu_custom_call.1} parent=1 // pred_check_branch
      %28 = sbr.rel (0) target = $region9
    $region8: #{tpu_custom_call.1} parent=1 // pred_region
      %s30 = ssub.s32 512, 512
      %31 = vsyncadd [#allocation7], %s30
      %s32 = sshll.u32 [#allocation6], 4
      %s33 = int_to_ptr.vmem [resolvable:$true] %s32
      %38 = dma.hbm_to_vmem [thread:$0]  %s1, 512, %s33, [#allocation7], 128, 128, 8
    $region9: #{tpu_custom_call.1} parent=1 // pred_fallthru
      _
    // Predicated region
    $region10: #{tpu_custom_call.1} parent=1 // pred_check
      _
    $region11: #{tpu_custom_call.1} parent=1 // pred_check_branch
      %40 = sbr.rel (0) target = $region13
    $region12: #{tpu_custom_call.1} parent=1 // pred_region
      %s42 = ssub.s32 16, 16
      %43 = vsyncadd [#allocation7], %s42
      %s45 = sshll.u32 [#allocation8], 4
      %s46 = int_to_ptr.vmem [resolvable:$true] %s45
      %48 = dma.hbm_to_vmem [thread:$0]  %s2, 16, %s46, [#allocation7]
    $region13: #{tpu_custom_call.1} parent=1 // pred_fallthru
      _
    // Predicated region
    $region14: #{tpu_custom_call.1} parent=1 // pred_check
      _
    $region15: #{tpu_custom_call.1} parent=1 // pred_check_branch
      %50 = sbr.rel (0) target = $region17
    $region16: #{tpu_custom_call.1} parent=1 // pred_region
      %s52 = ssub.s32 1024, 1024
      %53 = vsyncadd [#allocation10], %s52
      %s54 = sshll.u32 [#allocation9], 4
      %s55 = int_to_ptr.vmem [resolvable:$true] %s54
      %60 = dma.hbm_to_vmem [thread:$0]  %s3, 1024, %s55, [#allocation10], 64, 64, 4
    $region17: #{tpu_custom_call.1} parent=1 // pred_fallthru
      _
    // Predicated region
    $region18: #{tpu_custom_call.1} parent=1 // pred_check
      _
    $region19: #{tpu_custom_call.1} parent=1 // pred_check_branch
      %62 = sbr.rel (0) target = $region21
    $region20: #{tpu_custom_call.1} parent=1 // pred_region
      %s64 = ssub.s32 16, 16
      %65 = vsyncadd [#allocation10], %s64
      %s67 = sshll.u32 [#allocation11], 4
      %s68 = int_to_ptr.vmem [resolvable:$true] %s67
      %70 = dma.hbm_to_vmem [thread:$0]  %s4, 16, %s68, [#allocation10]
    $region21: #{tpu_custom_call.1} parent=1 // pred_fallthru
      _
    // Predicated region
    $region22: #{tpu_custom_call.1} parent=1 // pred_check
      _
    $region23: #{tpu_custom_call.1} parent=1 // pred_check_branch
      %72 = sbr.rel (0) target = $region25
    $region24: #{tpu_custom_call.1} parent=1 // pred_region
      %s74 = ssub.s32 1024, 1024
      %75 = vsyncadd [#allocation13], %s74
      %s76 = sshll.u32 [#allocation12], 4
      %s77 = int_to_ptr.vmem [resolvable:$true] %s76
      %82 = dma.hbm_to_vmem [thread:$0]  %s5, 1024, %s77, [#allocation13], 64, 64, 4
    $region25: #{tpu_custom_call.1} parent=1 // pred_fallthru
      _
    // Predicated region
    $region26: #{tpu_custom_call.1} parent=1 // pred_check
      _
    $region27: #{tpu_custom_call.1} parent=1 // pred_check_branch
      %84 = sbr.rel (0) target = $region29
    $region28: #{tpu_custom_call.1} parent=1 // pred_region
      %s86 = ssub.s32 16, 16
      %87 = vsyncadd [#allocation13], %s86
      %s89 = sshll.u32 [#allocation14], 4
      %s90 = int_to_ptr.vmem [resolvable:$true] %s89
      %92 = dma.hbm_to_vmem [thread:$0]  %s6, 16, %s90, [#allocation13]
    $region29: #{tpu_custom_call.1} parent=1 // pred_fallthru
      _
    // Predicated region
    $region30: #{tpu_custom_call.1} parent=1 // pred_check
      _
    $region31: #{tpu_custom_call.1} parent=1 // pred_check_branch
      %94 = sbr.rel (0) target = $region33
    $region32: #{tpu_custom_call.1} parent=1 // pred_region
      %95 = dma.done [#allocation4], 128
    $region33: #{tpu_custom_call.1} parent=1 // pred_fallthru
      _
    // Predicated region
    $region34: #{tpu_custom_call.1} parent=1 // pred_check
      _
    $region35: #{tpu_custom_call.1} parent=1 // pred_check_branch
      %97 = sbr.rel (0) target = $region37
    $region36: #{tpu_custom_call.1} parent=1 // pred_region
      %98 = dma.done [#allocation7], 512
    $region37: #{tpu_custom_call.1} parent=1 // pred_fallthru
      _
    // Predicated region
    $region38: #{tpu_custom_call.1} parent=1 // pred_check
      _
    $region39: #{tpu_custom_call.1} parent=1 // pred_check_branch
      %100 = sbr.rel (0) target = $region41
    $region40: #{tpu_custom_call.1} parent=1 // pred_region
      %101 = dma.done [#allocation7], 16
    $region41: #{tpu_custom_call.1} parent=1 // pred_fallthru
      _
    // Predicated region
    $region42: #{tpu_custom_call.1} parent=1 // pred_check
      _
    $region43: #{tpu_custom_call.1} parent=1 // pred_check_branch
      %103 = sbr.rel (0) target = $region45
    $region44: #{tpu_custom_call.1} parent=1 // pred_region
      %104 = dma.done [#allocation10], 1024
    $region45: #{tpu_custom_call.1} parent=1 // pred_fallthru
      _
    // Predicated region
    $region46: #{tpu_custom_call.1} parent=1 // pred_check
      _
    $region47: #{tpu_custom_call.1} parent=1 // pred_check_branch
      %106 = sbr.rel (0) target = $region49
    $region48: #{tpu_custom_call.1} parent=1 // pred_region
      %107 = dma.done [#allocation10], 16
    $region49: #{tpu_custom_call.1} parent=1 // pred_fallthru
      _
    // Predicated region
    $region50: #{tpu_custom_call.1} parent=1 // pred_check
      _
    $region51: #{tpu_custom_call.1} parent=1 // pred_check_branch
      %109 = sbr.rel (0) target = $region53
    $region52: #{tpu_custom_call.1} parent=1 // pred_region
      %110 = dma.done [#allocation13], 1024
    $region53: #{tpu_custom_call.1} parent=1 // pred_fallthru
      _
    // Predicated region
    $region54: #{tpu_custom_call.1} parent=1 // pred_check
      _
    $region55: #{tpu_custom_call.1} parent=1 // pred_check_branch
      %112 = sbr.rel (0) target = $region57
    $region56: #{tpu_custom_call.1} parent=1 // pred_region
      %113 = dma.done [#allocation13], 16
    $region57: #{tpu_custom_call.1} parent=1 // pred_fallthru
      _
    %p115 = scmp.eq.s32.totalorder 0, 0
    // Predicated region
    $region58: #{tpu_custom_call.1} parent=1 // pred_check
      %p116 = pneg %p115
    $region59: #{tpu_custom_call.1} parent=1 // pred_check_branch
      %118 = sbr.rel (%p116) target = $region61
    $region60: #{tpu_custom_call.1} parent=1 // pred_region
      %v119 = vld [vmem:[#allocation3] sm:$0xff]
      %v120 = vld [vmem:[#allocation6] sm:$0xff]
      %v121 = vld [vmem:[#allocation6 + $0x8] sm:$0xff]
      %v122 = vld [vmem:[#allocation6 + $0x10] sm:$0xff]
      %v123 = vld [vmem:[#allocation6 + $0x18] sm:$0xff]
      %v124 = vld [vmem:[#allocation8] sm:$0x1]
      %v126 = vlaneseq
      %v127 = vshrl.u32 %v126, 7
      %v128 = vsub.s32 0, %v127
      %v129 = vrot.slane %v124, %v128
      %vm131 = vcmask 261120
      %v133 = vsel %vm131, %v119, 0
      %135 = vmatprep.subr.mxu0 0.0
      %136 = vmatpush1.msra.mxu0 %v120
      %137 = vmatprep.subr.mxu0 0.0
      %138 = vmatpush1.msra.mxu0 %v121
      %139 = vmatprep.subr.mxu0 0.0
      %140 = vmatpush1.msra.mxu0 %v122
      %141 = vmatprep.subr.mxu0 0.0
      %142 = vmatpush1.msra.mxu0 %v123
      %143 = vmatprep.subr.mxu0 0.0
      %144 = vmatpush1.msra.mxu0 0.0
      %145 = vmatprep.subr.mxu0 0.0
      %146 = vmatpush1.msra.mxu0 0.0
      %147 = vmatprep.subr.mxu0 0.0
      %148 = vmatpush1.msra.mxu0 0.0
      %149 = vmatprep.subr.mxu0 0.0
      %150 = vmatpush1.msra.mxu0 0.0
      %151 = vmatprep.subr.mxu0 0.0
      %152 = vmatpush1.msra.mxu0 0.0
      %153 = vmatprep.subr.mxu0 0.0
      %154 = vmatpush1.msra.mxu0 0.0
      %155 = vmatprep.subr.mxu0 0.0
      %156 = vmatpush1.msra.mxu0 0.0
      %157 = vmatprep.subr.mxu0 0.0
      %158 = vmatpush1.msra.mxu0 0.0
      %159 = vmatprep.subr.mxu0 0.0
      %160 = vmatpush1.msra.mxu0 0.0
      %161 = vmatprep.subr.mxu0 0.0
      %162 = vmatpush1.msra.mxu0 0.0
      %163 = vmatprep.subr.mxu0 0.0
      %164 = vmatpush1.msra.mxu0 0.0
      %165 = vmatprep.subr.mxu0 0.0
      %166 = vmatpush1.msra.mxu0 0.0
      %167 = vmatprep.subr.mxu0 0.0
      %168 = vmatpush1.msra.mxu0 0.0
      %169 = vmatprep.subr.mxu0 0.0
      %170 = vmatpush1.msra.mxu0 0.0
      %171 = vmatprep.subr.mxu0 0.0
      %172 = vmatpush1.msra.mxu0 0.0
      %173 = vmatprep.subr.mxu0 0.0
      %174 = vmatpush1.msra.mxu0 0.0
      %175 = vmatprep.subr.mxu0 0.0
      %176 = vmatpush1.msra.mxu0 0.0
      %177 = vmatprep.subr.mxu0 0.0
      %178 = vmatpush1.msra.mxu0 0.0
      %179 = vmatprep.subr.mxu0 0.0
      %180 = vmatpush1.msra.mxu0 0.0
      %181 = vmatprep.subr.mxu0 0.0
      %182 = vmatpush1.msra.mxu0 0.0
      %183 = vmatprep.subr.mxu0 0.0
      %184 = vmatpush1.msra.mxu0 0.0
      %185 = vmatprep.subr.mxu0 0.0
      %186 = vmatpush1.msra.mxu0 0.0
      %187 = vmatprep.subr.mxu0 0.0
      %188 = vmatpush1.msra.mxu0 0.0
      %189 = vmatprep.subr.mxu0 0.0
      %190 = vmatpush1.msra.mxu0 0.0
      %191 = vmatprep.subr.mxu0 0.0
      %192 = vmatpush1.msra.mxu0 0.0
      %193 = vmatprep.subr.mxu0 0.0
      %194 = vmatpush1.msra.mxu0 0.0
      %195 = vmatprep.subr.mxu0 0.0
      %196 = vmatpush1.msra.mxu0 0.0
      %197 = vmatprep.subr.mxu0 0.0
      %198 = vmatpush1.msra.mxu0 0.0
      %199 = vmatprep.mubr.f32.mxu0 0.0
      %200 = vmatmul.mubr.f32.gmra.mrb[0].mxu0 %v133
      %v201 = vpop.f32.mrb[0].mxu0
      %v202 = vadd.f32 %v129, %v201
      %v203 = vpop.f32.mrb[0].mxu0
      %204 = vdwg.mxu0
      %v205 = vmax.f32 %v202, 0.0
      %v206 = vpack.c.bf16 %v205, %v205
      %v207 = vld [vmem:[#allocation9] sm:$0xf]
      %v208 = vld [vmem:[#allocation9 + $0x4] sm:$0xf]
      %v209 = vld [vmem:[#allocation9 + $0x8] sm:$0xf]
      %v210 = vld [vmem:[#allocation9 + $0xc] sm:$0xf]
      %v211 = vld [vmem:[#allocation9 + $0x10] sm:$0xf]
      %v212 = vld [vmem:[#allocation9 + $0x14] sm:$0xf]
      %v213 = vld [vmem:[#allocation9 + $0x18] sm:$0xf]
      %v214 = vld [vmem:[#allocation9 + $0x1c] sm:$0xf]
      %v215 = vld [vmem:[#allocation9 + $0x20] sm:$0xf]
      %v216 = vld [vmem:[#allocation9 + $0x24] sm:$0xf]
      %v217 = vld [vmem:[#allocation9 + $0x28] sm:$0xf]
      %v218 = vld [vmem:[#allocation9 + $0x2c] sm:$0xf]
      %v219 = vld [vmem:[#allocation9 + $0x30] sm:$0xf]
      %v220 = vld [vmem:[#allocation9 + $0x34] sm:$0xf]
      %v221 = vld [vmem:[#allocation9 + $0x38] sm:$0xf]
      %v222 = vld [vmem:[#allocation9 + $0x3c] sm:$0xf]
      %v223 = vld [vmem:[#allocation11] sm:$0x1]
      %v225 = vlaneseq
      %v226 = vshrl.u32 %v225, 7
      %v227 = vsub.s32 0, %v226
      %v228 = vrot.slane %v223, %v227
      %v246 = vunpack.c.l.b16 %v207
      %v247 = vunpack.c.l.b16 %v208
      %v248 = vunpack.c.l.b16 %v209
      %v249 = vunpack.c.l.b16 %v210
      %v250 = vunpack.c.l.b16 %v211
      %v251 = vunpack.c.l.b16 %v212
      %v252 = vunpack.c.l.b16 %v213
      %v253 = vunpack.c.l.b16 %v214
      %v254 = vunpack.c.l.b16 %v215
      %v255 = vunpack.c.l.b16 %v216
      %v256 = vunpack.c.l.b16 %v217
      %v257 = vunpack.c.l.b16 %v218
      %v258 = vunpack.c.l.b16 %v219
      %v259 = vunpack.c.l.b16 %v220
      %v260 = vunpack.c.l.b16 %v221
      %v261 = vunpack.c.l.b16 %v222
      %v262 = vpack.c.b16 %v247, %v246
      %v263 = vpack.c.b16 %v249, %v248
      %v264 = vpack.c.b16 %v251, %v250
      %v265 = vpack.c.b16 %v253, %v252
      %v266 = vpack.c.b16 %v255, %v254
      %v267 = vpack.c.b16 %v257, %v256
      %v268 = vpack.c.b16 %v259, %v258
      %v269 = vpack.c.b16 %v261, %v260
      %278 = vmatprep.subr.bf16.mxu0 0
      %279 = vmatpush1.bf16.msra.mxu0 %v262
      %280 = vmatprep.subr.bf16.mxu0 0
      %281 = vmatpush1.bf16.msra.mxu0 %v263
      %282 = vmatprep.subr.bf16.mxu0 0
      %283 = vmatpush1.bf16.msra.mxu0 %v264
      %284 = vmatprep.subr.bf16.mxu0 0
      %285 = vmatpush1.bf16.msra.mxu0 %v265
      %286 = vmatprep.subr.bf16.mxu0 0
      %287 = vmatpush1.bf16.msra.mxu0 %v266
      %288 = vmatprep.subr.bf16.mxu0 0
      %289 = vmatpush1.bf16.msra.mxu0 %v267
      %290 = vmatprep.subr.bf16.mxu0 0
      %291 = vmatpush1.bf16.msra.mxu0 %v268
      %292 = vmatprep.subr.bf16.mxu0 0
      %293 = vmatpush1.bf16.msra.mxu0 %v269
      %294 = vmatprep.subr.bf16.mxu0 0
      %295 = vmatpush1.bf16.msra.mxu0 0
      %296 = vmatprep.subr.bf16.mxu0 0
      %297 = vmatpush1.bf16.msra.mxu0 0
      %298 = vmatprep.subr.bf16.mxu0 0
      %299 = vmatpush1.bf16.msra.mxu0 0
      %300 = vmatprep.subr.bf16.mxu0 0
      %301 = vmatpush1.bf16.msra.mxu0 0
      %302 = vmatprep.subr.bf16.mxu0 0
      %303 = vmatpush1.bf16.msra.mxu0 0
      %304 = vmatprep.subr.bf16.mxu0 0
      %305 = vmatpush1.bf16.msra.mxu0 0
      %306 = vmatprep.subr.bf16.mxu0 0
      %307 = vmatpush1.bf16.msra.mxu0 0
      %308 = vmatprep.subr.bf16.mxu0 0
      %309 = vmatpush1.bf16.msra.mxu0 0
      %310 = vmatprep.mubr.bf16.mxu0 0
      %311 = vmatmul.mubr.bf16.gmra.mrb[0].mxu0 %v206
      %v312 = vpop.f32.mrb[0].mxu0
      %v313 = vadd.f32 %v228, %v312
      %v314 = vpop.f32.mrb[0].mxu0
      %v315 = vpop.f32.mrb[0].mxu0
      %v316 = vpop.f32.mrb[0].mxu0
      %317 = vdwg.mxu0
      %v318 = vmax.f32 %v313, 0.0
      %v319 = vadd.f32 %v205, %v318
      %v320 = vpack.c.bf16 %v319, %v319
      %321 = vst [vmem:[#allocation2] sm:$0xf] %v320
    $region61: #{tpu_custom_call.1} parent=1 // pred_fallthru
      _
    %v322 = vld [vmem:[#allocation2] sm:$0xf]
    %v323 = vld [vmem:[#allocation12] sm:$0xf]
    %v324 = vld [vmem:[#allocation12 + $0x4] sm:$0xf]
    %v325 = vld [vmem:[#allocation12 + $0x8] sm:$0xf]
    %v326 = vld [vmem:[#allocation12 + $0xc] sm:$0xf]
    %v327 = vld [vmem:[#allocation12 + $0x10] sm:$0xf]
    %v328 = vld [vmem:[#allocation12 + $0x14] sm:$0xf]
    %v329 = vld [vmem:[#allocation12 + $0x18] sm:$0xf]
    %v330 = vld [vmem:[#allocation12 + $0x1c] sm:$0xf]
    %v331 = vld [vmem:[#allocation12 + $0x20] sm:$0xf]
    %v332 = vld [vmem:[#allocation12 + $0x24] sm:$0xf]
    %v333 = vld [vmem:[#allocation12 + $0x28] sm:$0xf]
    %v334 = vld [vmem:[#allocation12 + $0x2c] sm:$0xf]
    %v335 = vld [vmem:[#allocation12 + $0x30] sm:$0xf]
    %v336 = vld [vmem:[#allocation12 + $0x34] sm:$0xf]
    %v337 = vld [vmem:[#allocation12 + $0x38] sm:$0xf]
    %v338 = vld [vmem:[#allocation12 + $0x3c] sm:$0xf]
    %v339 = vld [vmem:[#allocation14] sm:$0x1]
    %v341 = vlaneseq
    %v342 = vshrl.u32 %v341, 7
    %v343 = vsub.s32 0, %v342
    %v344 = vrot.slane %v339, %v343
    %v362 = vunpack.c.l.b16 %v323
    %v363 = vunpack.c.l.b16 %v324
    %v364 = vunpack.c.l.b16 %v325
    %v365 = vunpack.c.l.b16 %v326
    %v366 = vunpack.c.l.b16 %v327
    %v367 = vunpack.c.l.b16 %v328
    %v368 = vunpack.c.l.b16 %v329
    %v369 = vunpack.c.l.b16 %v330
    %v370 = vunpack.c.l.b16 %v331
    %v371 = vunpack.c.l.b16 %v332
    %v372 = vunpack.c.l.b16 %v333
    %v373 = vunpack.c.l.b16 %v334
    %v374 = vunpack.c.l.b16 %v335
    %v375 = vunpack.c.l.b16 %v336
    %v376 = vunpack.c.l.b16 %v337
    %v377 = vunpack.c.l.b16 %v338
    %v378 = vpack.c.b16 %v363, %v362
    %v379 = vpack.c.b16 %v365, %v364
    %v380 = vpack.c.b16 %v367, %v366
    %v381 = vpack.c.b16 %v369, %v368
    %v382 = vpack.c.b16 %v371, %v370
    %v383 = vpack.c.b16 %v373, %v372
    %v384 = vpack.c.b16 %v375, %v374
    %v385 = vpack.c.b16 %v377, %v376
    %394 = vmatprep.subr.bf16.mxu0 0
    %395 = vmatpush1.bf16.msra.mxu0 %v378
    %396 = vmatprep.subr.bf16.mxu0 0
    %397 = vmatpush1.bf16.msra.mxu0 %v379
    %398 = vmatprep.subr.bf16.mxu0 0
    %399 = vmatpush1.bf16.msra.mxu0 %v380
    %400 = vmatprep.subr.bf16.mxu0 0
    %401 = vmatpush1.bf16.msra.mxu0 %v381
    %402 = vmatprep.subr.bf16.mxu0 0
    %403 = vmatpush1.bf16.msra.mxu0 %v382
    %404 = vmatprep.subr.bf16.mxu0 0
    %405 = vmatpush1.bf16.msra.mxu0 %v383
    %406 = vmatprep.subr.bf16.mxu0 0
    %407 = vmatpush1.bf16.msra.mxu0 %v384
    %408 = vmatprep.subr.bf16.mxu0 0
    %409 = vmatpush1.bf16.msra.mxu0 %v385
    %410 = vmatprep.subr.bf16.mxu0 0
    %411 = vmatpush1.bf16.msra.mxu0 0
    %412 = vmatprep.subr.bf16.mxu0 0
    %413 = vmatpush1.bf16.msra.mxu0 0
    %414 = vmatprep.subr.bf16.mxu0 0
    %415 = vmatpush1.bf16.msra.mxu0 0
    %416 = vmatprep.subr.bf16.mxu0 0
    %417 = vmatpush1.bf16.msra.mxu0 0
    %418 = vmatprep.subr.bf16.mxu0 0
    %419 = vmatpush1.bf16.msra.mxu0 0
    %420 = vmatprep.subr.bf16.mxu0 0
    %421 = vmatpush1.bf16.msra.mxu0 0
    %422 = vmatprep.subr.bf16.mxu0 0
    %423 = vmatpush1.bf16.msra.mxu0 0
    %424 = vmatprep.subr.bf16.mxu0 0
    %425 = vmatpush1.bf16.msra.mxu0 0
    %426 = vmatprep.mubr.bf16.mxu0 0
    %427 = vmatmul.mubr.bf16.gmra.mrb[0].mxu0 %v322
    %v428 = vpop.f32.mrb[0].mxu0
    %v429 = vadd.f32 %v344, %v428
    %v430 = vpop.f32.mrb[0].mxu0
    %v431 = vpop.f32.mrb[0].mxu0
    %v432 = vpop.f32.mrb[0].mxu0
    %433 = vdwg.mxu0
    %434 = vst [vmem:[#allocation15] sm:$0xff] %v429
    // Predicated region
    $region62: #{tpu_custom_call.1} parent=1 // pred_check
      _
    $region63: #{tpu_custom_call.1} parent=1 // pred_check_branch
      %436 = sbr.rel (0) target = $region65
    $region64: #{tpu_custom_call.1} parent=1 // pred_region
      %s438 = ssub.s32 128, 128
      %439 = vsyncadd [#allocation5], %s438
      %s441 = sshll.u32 [#allocation15], 4
      %s442 = int_to_ptr.vmem [resolvable:$true] %s441
      %444 = dma.vmem_to_hbm [thread:$0]  %s442, 128, %s7, [#allocation5]
    $region65: #{tpu_custom_call.1} parent=1 // pred_fallthru
      _
    // Predicated region
    $region66: #{tpu_custom_call.1} parent=1 // pred_check
      _
    $region67: #{tpu_custom_call.1} parent=1 // pred_check_branch
      %446 = sbr.rel (0) target = $region69
    $region68: #{tpu_custom_call.1} parent=1 // pred_region
      %447 = dma.done [#allocation5], 128
    $region69: #{tpu_custom_call.1} parent=1 // pred_fallthru
      _
    %448 = vsyncpa [#allocation4], 1
    %449 = vsyncpa [#allocation7], 1
    %450 = vsyncpa [#allocation10], 1
    %451 = vsyncpa [#allocation13], 1
    %452 = vsyncpa [#allocation5], 1

// kernel: tpu_custom_call.1
$region0: #{tpu_custom_call.1}
  #allocation0 [shape = 'u32[]', space=smem, size = 0x4, offset = 0x4, fixed_abs, tag = 'smem constant byte address 0x4 - core index']
  #allocation1 [shape = 'u32[144,128]{1,0:T(1,128)}', space=vmem, size = 0x12000, scoped, tag = 'internal scratch']
  #allocation2 [shape = 'bf16[8,128]{1,0:T(8,128)(2,1)}', space=vmem, size = 0x800, scoped, tag = 'scratch operand']
  %s0 = inlined_call_operand.hbm [shape: f32[8,32], index: 0, kind: input, shape index: {}]
  %s1 = inlined_call_operand.hbm [shape: f32[32,128], index: 1, kind: input, shape index: {}]
  %s2 = inlined_call_operand.hbm [shape: f32[1,128], index: 2, kind: input, shape index: {}]
  %s3 = inlined_call_operand.hbm [shape: bf16[128,128], index: 3, kind: input, shape index: {}]
  %s4 = inlined_call_operand.hbm [shape: f32[1,128], index: 4, kind: input, shape index: {}]
  %s5 = inlined_call_operand.hbm [shape: bf16[128,128], index: 5, kind: input, shape index: {}]
  %s6 = inlined_call_operand.hbm [shape: f32[1,128], index: 6, kind: input, shape index: {}]
  %s7 = inlined_call_operand.hbm [shape: f32[8,128], index: 7, kind: output, shape index: {}]
  %s8 = sld [smem:[#allocation0]]
  $region70: #{tpu_custom_call.1} parent=0
    _
  %s10 = ssub.s32 1, %s8
  %s11 = scalar_select 0, %s10, %s8
  $region1: #{tpu_custom_call.1} parent=0
    #allocation3 [shape = 'u8[4096]{0}', space=vmem, size = 0x1000, scoped, tag = 'input window, operand 0, single buffered']
    #allocation4 [shape = 's32[1]{0}', space=sflag, size = 0x4, scoped, tag = 'scoped memory for tpu_custom_call.1']
    #allocation5 [shape = 's32[1]{0}', space=sflag, size = 0x4, scoped, tag = 'scoped memory for tpu_custom_call.1']
    #allocation6 [shape = 'u8[16384]{0}', space=vmem, size = 0x4000, scoped, tag = 'input window, operand 1, single buffered']
    #allocation7 [shape = 's32[1]{0}', space=sflag, size = 0x4, scoped, tag = 'scoped memory for tpu_custom_call.1']
    #allocation8 [shape = 'u8[512]{0}', space=vmem, size = 0x400, scoped, tag = 'input window, operand 2, single buffered']
    #allocation9 [shape = 'u8[32768]{0}', space=vmem, size = 0x8000, scoped, tag = 'input window, operand 3, single buffered']
    #allocation10 [shape = 's32[1]{0}', space=sflag, size = 0x4, scoped, tag = 'scoped memory for tpu_custom_call.1']
    #allocation11 [shape = 'u8[512]{0}', space=vmem, size = 0x400, scoped, tag = 'input window, operand 4, single buffered']
    #allocation12 [shape = 'u8[32768]{0}', space=vmem, size = 0x8000, scoped, tag = 'input window, operand 5, single buffered']
    #allocation13 [shape = 's32[1]{0}', space=sflag, size = 0x4, scoped, tag = 'scoped memory for tpu_custom_call.1']
    #allocation14 [shape = 'u8[512]{0}', space=vmem, size = 0x400, scoped, tag = 'input window, operand 6, single buffered']
    #allocation15 [shape = 'u8[4096]{0}', space=vmem, size = 0x1000, scoped, tag = 'output window, operand 0, single buffered']
    %12 = vsyncpa [#allocation4], 0
    %13 = vsyncpa [#allocation7], 0
    %14 = vsyncpa [#allocation10], 0
    %15 = vsyncpa [#allocation13], 0
    %16 = vsyncpa [#allocation5], 0
    // Predicated region
    $region2: #{tpu_custom_call.1} parent=1 // pred_check
      _
    $region3: #{tpu_custom_call.1} parent=1 // pred_check_branch
      %18 = sbr.rel (0) target = $region5
    $region4: #{tpu_custom_call.1} parent=1 // pred_region
      %s20 = ssub.s32 128, 128
      %21 = vsyncadd [#allocation4], %s20
      %s23 = sshll.u32 [#allocation3], 4
      %s24 = int_to_ptr.vmem [resolvable:$true] %s23
      %26 = dma.hbm_to_vmem [thread:$0]  %s0, 128, %s24, [#allocation4]
    $region5: #{tpu_custom_call.1} parent=1 // pred_fallthru
      _
    // Predicated region
    $region6: #{tpu_custom_call.1} parent=1 // pred_check
      _
    $region7: #{tpu_custom_call.1} parent=1 // pred_check_branch
      %28 = sbr.rel (0) target = $region9
    $region8: #{tpu_custom_call.1} parent=1 // pred_region
      %s30 = ssub.s32 512, 512
      %31 = vsyncadd [#allocation7], %s30
      %s32 = sshll.u32 [#allocation6], 4
      %s33 = int_to_ptr.vmem [resolvable:$true] %s32
      %38 = dma.hbm_to_vmem [thread:$0]  %s1, 512, %s33, [#allocation7], 128, 128, 8
    $region9: #{tpu_custom_call.1} parent=1 // pred_fallthru
      _
    // Predicated region
    $region10: #{tpu_custom_call.1} parent=1 // pred_check
      _
    $region11: #{tpu_custom_call.1} parent=1 // pred_check_branch
      %40 = sbr.rel (0) target = $region13
    $region12: #{tpu_custom_call.1} parent=1 // pred_region
      %s42 = ssub.s32 16, 16
      %43 = vsyncadd [#allocation7], %s42
      %s45 = sshll.u32 [#allocation8], 4
      %s46 = int_to_ptr.vmem [resolvable:$true] %s45
      %48 = dma.hbm_to_vmem [thread:$0]  %s2, 16, %s46, [#allocation7]
    $region13: #{tpu_custom_call.1} parent=1 // pred_fallthru
      _
    // Predicated region
    $region14: #{tpu_custom_call.1} parent=1 // pred_check
      _
    $region15: #{tpu_custom_call.1} parent=1 // pred_check_branch
      %50 = sbr.rel (0) target = $region17
    $region16: #{tpu_custom_call.1} parent=1 // pred_region
      %s52 = ssub.s32 1024, 1024
      %53 = vsyncadd [#allocation10], %s52
      %s54 = sshll.u32 [#allocation9], 4
      %s55 = int_to_ptr.vmem [resolvable:$true] %s54
      %60 = dma.hbm_to_vmem [thread:$0]  %s3, 1024, %s55, [#allocation10], 64, 64, 4
    $region17: #{tpu_custom_call.1} parent=1 // pred_fallthru
      _
    // Predicated region
    $region18: #{tpu_custom_call.1} parent=1 // pred_check
      _
    $region19: #{tpu_custom_call.1} parent=1 // pred_check_branch
      %62 = sbr.rel (0) target = $region21
    $region20: #{tpu_custom_call.1} parent=1 // pred_region
      %s64 = ssub.s32 16, 16
      %65 = vsyncadd [#allocation10], %s64
      %s67 = sshll.u32 [#allocation11], 4
      %s68 = int_to_ptr.vmem [resolvable:$true] %s67
      %70 = dma.hbm_to_vmem [thread:$0]  %s4, 16, %s68, [#allocation10]
    $region21: #{tpu_custom_call.1} parent=1 // pred_fallthru
      _
    // Predicated region
    $region22: #{tpu_custom_call.1} parent=1 // pred_check
      _
    $region23: #{tpu_custom_call.1} parent=1 // pred_check_branch
      %72 = sbr.rel (0) target = $region25
    $region24: #{tpu_custom_call.1} parent=1 // pred_region
      %s74 = ssub.s32 1024, 1024
      %75 = vsyncadd [#allocation13], %s74
      %s76 = sshll.u32 [#allocation12], 4
      %s77 = int_to_ptr.vmem [resolvable:$true] %s76
      %82 = dma.hbm_to_vmem [thread:$0]  %s5, 1024, %s77, [#allocation13], 64, 64, 4
    $region25: #{tpu_custom_call.1} parent=1 // pred_fallthru
      _
    // Predicated region
    $region26: #{tpu_custom_call.1} parent=1 // pred_check
      _
    $region27: #{tpu_custom_call.1} parent=1 // pred_check_branch
      %84 = sbr.rel (0) target = $region29
    $region28: #{tpu_custom_call.1} parent=1 // pred_region
      %s86 = ssub.s32 16, 16
      %87 = vsyncadd [#allocation13], %s86
      %s89 = sshll.u32 [#allocation14], 4
      %s90 = int_to_ptr.vmem [resolvable:$true] %s89
      %92 = dma.hbm_to_vmem [thread:$0]  %s6, 16, %s90, [#allocation13]
    $region29: #{tpu_custom_call.1} parent=1 // pred_fallthru
      _
    // Predicated region
    $region30: #{tpu_custom_call.1} parent=1 // pred_check
      _
    $region31: #{tpu_custom_call.1} parent=1 // pred_check_branch
      %94 = sbr.rel (0) target = $region33
    $region32: #{tpu_custom_call.1} parent=1 // pred_region
      %95 = dma.done [#allocation4], 128
    $region33: #{tpu_custom_call.1} parent=1 // pred_fallthru
      _
    // Predicated region
    $region34: #{tpu_custom_call.1} parent=1 // pred_check
      _
    $region35: #{tpu_custom_call.1} parent=1 // pred_check_branch
      %97 = sbr.rel (0) target = $region37
    $region36: #{tpu_custom_call.1} parent=1 // pred_region
      %98 = dma.done [#allocation7], 512
    $region37: #{tpu_custom_call.1} parent=1 // pred_fallthru
      _
    // Predicated region
    $region38: #{tpu_custom_call.1} parent=1 // pred_check
      _
    $region39: #{tpu_custom_call.1} parent=1 // pred_check_branch
      %100 = sbr.rel (0) target = $region41
    $region40: #{tpu_custom_call.1} parent=1 // pred_region
      %101 = dma.done [#allocation7], 16
    $region41: #{tpu_custom_call.1} parent=1 // pred_fallthru
      _
    // Predicated region
    $region42: #{tpu_custom_call.1} parent=1 // pred_check
      _
    $region43: #{tpu_custom_call.1} parent=1 // pred_check_branch
      %103 = sbr.rel (0) target = $region45
    $region44: #{tpu_custom_call.1} parent=1 // pred_region
      %104 = dma.done [#allocation10], 1024
    $region45: #{tpu_custom_call.1} parent=1 // pred_fallthru
      _
    // Predicated region
    $region46: #{tpu_custom_call.1} parent=1 // pred_check
      _
    $region47: #{tpu_custom_call.1} parent=1 // pred_check_branch
      %106 = sbr.rel (0) target = $region49
    $region48: #{tpu_custom_call.1} parent=1 // pred_region
      %107 = dma.done [#allocation10], 16
    $region49: #{tpu_custom_call.1} parent=1 // pred_fallthru
      _
    // Predicated region
    $region50: #{tpu_custom_call.1} parent=1 // pred_check
      _
    $region51: #{tpu_custom_call.1} parent=1 // pred_check_branch
      %109 = sbr.rel (0) target = $region53
    $region52: #{tpu_custom_call.1} parent=1 // pred_region
      %110 = dma.done [#allocation13], 1024
    $region53: #{tpu_custom_call.1} parent=1 // pred_fallthru
      _
    // Predicated region
    $region54: #{tpu_custom_call.1} parent=1 // pred_check
      _
    $region55: #{tpu_custom_call.1} parent=1 // pred_check_branch
      %112 = sbr.rel (0) target = $region57
    $region56: #{tpu_custom_call.1} parent=1 // pred_region
      %113 = dma.done [#allocation13], 16
    $region57: #{tpu_custom_call.1} parent=1 // pred_fallthru
      _
    %p115 = scmp.eq.s32.totalorder 0, 0
    // Predicated region
    $region58: #{tpu_custom_call.1} parent=1 // pred_check
      %p116 = pneg %p115
    $region59: #{tpu_custom_call.1} parent=1 // pred_check_branch
      %118 = sbr.rel (%p116) target = $region61
    $region60: #{tpu_custom_call.1} parent=1 // pred_region
      %v119 = vld [vmem:[#allocation3] sm:$0xff]
      %v120 = vld [vmem:[#allocation6] sm:$0xff]
      %v121 = vld [vmem:[#allocation6 + $0x8] sm:$0xff]
      %v122 = vld [vmem:[#allocation6 + $0x10] sm:$0xff]
      %v123 = vld [vmem:[#allocation6 + $0x18] sm:$0xff]
      %v124 = vld [vmem:[#allocation8] sm:$0x1]
      %v126 = vlaneseq
      %v127 = vshrl.u32 %v126, 7
      %v128 = vsub.s32 0, %v127
      %v129 = vrot.slane %v124, %v128
      %vm131 = vcmask 261120
      %v133 = vsel %vm131, %v119, 0
      %135 = vmatprep.subr.mxu0 0.0
      %136 = vmatpush1.msra.mxu0 %v120
      %137 = vmatprep.subr.mxu0 0.0
      %138 = vmatpush1.msra.mxu0 %v121
      %139 = vmatprep.subr.mxu0 0.0
      %140 = vmatpush1.msra.mxu0 %v122
      %141 = vmatprep.subr.mxu0 0.0
      %142 = vmatpush1.msra.mxu0 %v123
      %143 = vmatprep.subr.mxu0 0.0
      %144 = vmatpush1.msra.mxu0 0.0
      %145 = vmatprep.subr.mxu0 0.0
      %146 = vmatpush1.msra.mxu0 0.0
      %147 = vmatprep.subr.mxu0 0.0
      %148 = vmatpush1.msra.mxu0 0.0
      %149 = vmatprep.subr.mxu0 0.0
      %150 = vmatpush1.msra.mxu0 0.0
      %151 = vmatprep.subr.mxu0 0.0
      %152 = vmatpush1.msra.mxu0 0.0
      %153 = vmatprep.subr.mxu0 0.0
      %154 = vmatpush1.msra.mxu0 0.0
      %155 = vmatprep.subr.mxu0 0.0
      %156 = vmatpush1.msra.mxu0 0.0
      %157 = vmatprep.subr.mxu0 0.0
      %158 = vmatpush1.msra.mxu0 0.0
      %159 = vmatprep.subr.mxu0 0.0
      %160 = vmatpush1.msra.mxu0 0.0
      %161 = vmatprep.subr.mxu0 0.0
      %162 = vmatpush1.msra.mxu0 0.0
      %163 = vmatprep.subr.mxu0 0.0
      %164 = vmatpush1.msra.mxu0 0.0
      %165 = vmatprep.subr.mxu0 0.0
      %166 = vmatpush1.msra.mxu0 0.0
      %167 = vmatprep.subr.mxu0 0.0
      %168 = vmatpush1.msra.mxu0 0.0
      %169 = vmatprep.subr.mxu0 0.0
      %170 = vmatpush1.msra.mxu0 0.0
      %171 = vmatprep.subr.mxu0 0.0
      %172 = vmatpush1.msra.mxu0 0.0
      %173 = vmatprep.subr.mxu0 0.0
      %174 = vmatpush1.msra.mxu0 0.0
      %175 = vmatprep.subr.mxu0 0.0
      %176 = vmatpush1.msra.mxu0 0.0
      %177 = vmatprep.subr.mxu0 0.0
      %178 = vmatpush1.msra.mxu0 0.0
      %179 = vmatprep.subr.mxu0 0.0
      %180 = vmatpush1.msra.mxu0 0.0
      %181 = vmatprep.subr.mxu0 0.0
      %182 = vmatpush1.msra.mxu0 0.0
      %183 = vmatprep.subr.mxu0 0.0
      %184 = vmatpush1.msra.mxu0 0.0
      %185 = vmatprep.subr.mxu0 0.0
      %186 = vmatpush1.msra.mxu0 0.0
      %187 = vmatprep.subr.mxu0 0.0
      %188 = vmatpush1.msra.mxu0 0.0
      %189 = vmatprep.subr.mxu0 0.0
      %190 = vmatpush1.msra.mxu0 0.0
      %191 = vmatprep.subr.mxu0 0.0
      %192 = vmatpush1.msra.mxu0 0.0
      %193 = vmatprep.subr.mxu0 0.0
      %194 = vmatpush1.msra.mxu0 0.0
      %195 = vmatprep.subr.mxu0 0.0
      %196 = vmatpush1.msra.mxu0 0.0
      %197 = vmatprep.subr.mxu0 0.0
      %198 = vmatpush1.msra.mxu0 0.0
      %199 = vmatprep.mubr.f32.mxu0 0.0
      %200 = vmatmul.mubr.f32.gmra.mrb[0].mxu0 %v133
      %v201 = vpop.f32.mrb[0].mxu0
      %v202 = vadd.f32 %v129, %v201
      %v203 = vpop.f32.mrb[0].mxu0
      %204 = vdwg.mxu0
      %v205 = vmax.f32 %v202, 0.0
      %v206 = vpack.c.bf16 %v205, %v205
      %v207 = vld [vmem:[#allocation9] sm:$0xf]
      %v208 = vld [vmem:[#allocation9 + $0x4] sm:$0xf]
      %v209 = vld [vmem:[#allocation9 + $0x8] sm:$0xf]
      %v210 = vld [vmem:[#allocation9 + $0xc] sm:$0xf]
      %v211 = vld [vmem:[#allocation9 + $0x10] sm:$0xf]
      %v212 = vld [vmem:[#allocation9 + $0x14] sm:$0xf]
      %v213 = vld [vmem:[#allocation9 + $0x18] sm:$0xf]
      %v214 = vld [vmem:[#allocation9 + $0x1c] sm:$0xf]
      %v215 = vld [vmem:[#allocation9 + $0x20] sm:$0xf]
      %v216 = vld [vmem:[#allocation9 + $0x24] sm:$0xf]
      %v217 = vld [vmem:[#allocation9 + $0x28] sm:$0xf]
      %v218 = vld [vmem:[#allocation9 + $0x2c] sm:$0xf]
      %v219 = vld [vmem:[#allocation9 + $0x30] sm:$0xf]
      %v220 = vld [vmem:[#allocation9 + $0x34] sm:$0xf]
      %v221 = vld [vmem:[#allocation9 + $0x38] sm:$0xf]
      %v222 = vld [vmem:[#allocation9 + $0x3c] sm:$0xf]
      %v223 = vld [vmem:[#allocation11] sm:$0x1]
      %v225 = vlaneseq
      %v226 = vshrl.u32 %v225, 7
      %v227 = vsub.s32 0, %v226
      %v228 = vrot.slane %v223, %v227
      %v246 = vunpack.c.l.b16 %v207
      %v247 = vunpack.c.l.b16 %v208
      %v248 = vunpack.c.l.b16 %v209
      %v249 = vunpack.c.l.b16 %v210
      %v250 = vunpack.c.l.b16 %v211
      %v251 = vunpack.c.l.b16 %v212
      %v252 = vunpack.c.l.b16 %v213
      %v253 = vunpack.c.l.b16 %v214
      %v254 = vunpack.c.l.b16 %v215
      %v255 = vunpack.c.l.b16 %v216
      %v256 = vunpack.c.l.b16 %v217
      %v257 = vunpack.c.l.b16 %v218
      %v258 = vunpack.c.l.b16 %v219
      %v259 = vunpack.c.l.b16 %v220
      %v260 = vunpack.c.l.b16 %v221
      %v261 = vunpack.c.l.b16 %v222
      %v262 = vpack.c.b16 %v247, %v246
      %v263 = vpack.c.b16 %v249, %v248
      %v264 = vpack.c.b16 %v251, %v250
      %v265 = vpack.c.b16 %v253, %v252
      %v266 = vpack.c.b16 %v255, %v254
      %v267 = vpack.c.b16 %v257, %v256
      %v268 = vpack.c.b16 %v259, %v258
      %v269 = vpack.c.b16 %v261, %v260
      %278 = vmatprep.subr.bf16.mxu0 0
      %279 = vmatpush1.bf16.msra.mxu0 %v262
      %280 = vmatprep.subr.bf16.mxu0 0
      %281 = vmatpush1.bf16.msra.mxu0 %v263
      %282 = vmatprep.subr.bf16.mxu0 0
      %283 = vmatpush1.bf16.msra.mxu0 %v264
      %284 = vmatprep.subr.bf16.mxu0 0
      %285 = vmatpush1.bf16.msra.mxu0 %v265
      %286 = vmatprep.subr.bf16.mxu0 0
      %287 = vmatpush1.bf16.msra.mxu0 %v266
      %288 = vmatprep.subr.bf16.mxu0 0
      %289 = vmatpush1.bf16.msra.mxu0 %v267
      %290 = vmatprep.subr.bf16.mxu0 0
      %291 = vmatpush1.bf16.msra.mxu0 %v268
      %292 = vmatprep.subr.bf16.mxu0 0
      %293 = vmatpush1.bf16.msra.mxu0 %v269
      %294 = vmatprep.subr.bf16.mxu0 0
      %295 = vmatpush1.bf16.msra.mxu0 0
      %296 = vmatprep.subr.bf16.mxu0 0
      %297 = vmatpush1.bf16.msra.mxu0 0
      %298 = vmatprep.subr.bf16.mxu0 0
      %299 = vmatpush1.bf16.msra.mxu0 0
      %300 = vmatprep.subr.bf16.mxu0 0
      %301 = vmatpush1.bf16.msra.mxu0 0
      %302 = vmatprep.subr.bf16.mxu0 0
      %303 = vmatpush1.bf16.msra.mxu0 0
      %304 = vmatprep.subr.bf16.mxu0 0
      %305 = vmatpush1.bf16.msra.mxu0 0
      %306 = vmatprep.subr.bf16.mxu0 0
      %307 = vmatpush1.bf16.msra.mxu0 0
      %308 = vmatprep.subr.bf16.mxu0 0
      %309 = vmatpush1.bf16.msra.mxu0 0
      %310 = vmatprep.mubr.bf16.mxu0 0
      %311 = vmatmul.mubr.bf16.gmra.mrb[0].mxu0 %v206
      %v312 = vpop.f32.mrb[0].mxu0
      %v313 = vadd.f32 %v228, %v312
      %v314 = vpop.f32.mrb[0].mxu0
      %v315 = vpop.f32.mrb[0].mxu0
      %v316 = vpop.f32.mrb[0].mxu0
      %317 = vdwg.mxu0
      %v318 = vmax.f32 %v313, 0.0
      %v319 = vadd.f32 %v205, %v318
      %v320 = vpack.c.bf16 %v319, %v319
      %321 = vst [vmem:[#allocation2] sm:$0xf] %v320
    $region61: #{tpu_custom_call.1} parent=1 // pred_fallthru
      _
    %v322 = vld [vmem:[#allocation2] sm:$0xf]
    %v323 = vld [vmem:[#allocation12] sm:$0xf]
    %v324 = vld [vmem:[#allocation12 + $0x4] sm:$0xf]
    %v325 = vld [vmem:[#allocation12 + $0x8] sm:$0xf]
    %v326 = vld [vmem:[#allocation12 + $0xc] sm:$0xf]
    %v327 = vld [vmem:[#allocation12 + $0x10] sm:$0xf]
    %v328 = vld [vmem:[#allocation12 + $0x14] sm:$0xf]
    %v329 = vld [vmem:[#allocation12 + $0x18] sm:$0xf]
    %v330 = vld [vmem:[#allocation12 + $0x1c] sm:$0xf]
    %v331 = vld [vmem:[#allocation12 + $0x20] sm:$0xf]
    %v332 = vld [vmem:[#allocation12 + $0x24] sm:$0xf]
    %v333 = vld [vmem:[#allocation12 + $0x28] sm:$0xf]
    %v334 = vld [vmem:[#allocation12 + $0x2c] sm:$0xf]
    %v335 = vld [vmem:[#allocation12 + $0x30] sm:$0xf]
    %v336 = vld [vmem:[#allocation12 + $0x34] sm:$0xf]
    %v337 = vld [vmem:[#allocation12 + $0x38] sm:$0xf]
    %v338 = vld [vmem:[#allocation12 + $0x3c] sm:$0xf]
    %v339 = vld [vmem:[#allocation14] sm:$0x1]
    %v341 = vlaneseq
    %v342 = vshrl.u32 %v341, 7
    %v343 = vsub.s32 0, %v342
    %v344 = vrot.slane %v339, %v343
    %v362 = vunpack.c.l.b16 %v323
    %v363 = vunpack.c.l.b16 %v324
    %v364 = vunpack.c.l.b16 %v325
    %v365 = vunpack.c.l.b16 %v326
    %v366 = vunpack.c.l.b16 %v327
    %v367 = vunpack.c.l.b16 %v328
    %v368 = vunpack.c.l.b16 %v329
    %v369 = vunpack.c.l.b16 %v330
    %v370 = vunpack.c.l.b16 %v331
    %v371 = vunpack.c.l.b16 %v332
    %v372 = vunpack.c.l.b16 %v333
    %v373 = vunpack.c.l.b16 %v334
    %v374 = vunpack.c.l.b16 %v335
    %v375 = vunpack.c.l.b16 %v336
    %v376 = vunpack.c.l.b16 %v337
    %v377 = vunpack.c.l.b16 %v338
    %v378 = vpack.c.b16 %v363, %v362
    %v379 = vpack.c.b16 %v365, %v364
    %v380 = vpack.c.b16 %v367, %v366
    %v381 = vpack.c.b16 %v369, %v368
    %v382 = vpack.c.b16 %v371, %v370
    %v383 = vpack.c.b16 %v373, %v372
    %v384 = vpack.c.b16 %v375, %v374
    %v385 = vpack.c.b16 %v377, %v376
    %394 = vmatprep.subr.bf16.mxu0 0
    %395 = vmatpush1.bf16.msra.mxu0 %v378
    %396 = vmatprep.subr.bf16.mxu0 0
    %397 = vmatpush1.bf16.msra.mxu0 %v379
    %398 = vmatprep.subr.bf16.mxu0 0
    %399 = vmatpush1.bf16.msra.mxu0 %v380
    %400 = vmatprep.subr.bf16.mxu0 0
    %401 = vmatpush1.bf16.msra.mxu0 %v381
    %402 = vmatprep.subr.bf16.mxu0 0
    %403 = vmatpush1.bf16.msra.mxu0 %v382
    %404 = vmatprep.subr.bf16.mxu0 0
    %405 = vmatpush1.bf16.msra.mxu0 %v383
    %406 = vmatprep.subr.bf16.mxu0 0
    %407 = vmatpush1.bf16.msra.mxu0 %v384
    %408 = vmatprep.subr.bf16.mxu0 0
    %409 = vmatpush1.bf16.msra.mxu0 %v385
    %410 = vmatprep.subr.bf16.mxu0 0
    %411 = vmatpush1.bf16.msra.mxu0 0
    %412 = vmatprep.subr.bf16.mxu0 0
    %413 = vmatpush1.bf16.msra.mxu0 0
    %414 = vmatprep.subr.bf16.mxu0 0
    %415 = vmatpush1.bf16.msra.mxu0 0
    %416 = vmatprep.subr.bf16.mxu0 0
    %417 = vmatpush1.bf16.msra.mxu0 0
    %418 = vmatprep.subr.bf16.mxu0 0
    %419 = vmatpush1.bf16.msra.mxu0 0
    %420 = vmatprep.subr.bf16.mxu0 0
    %421 = vmatpush1.bf16.msra.mxu0 0
    %422 = vmatprep.subr.bf16.mxu0 0
    %423 = vmatpush1.bf16.msra.mxu0 0
    %424 = vmatprep.subr.bf16.mxu0 0
    %425 = vmatpush1.bf16.msra.mxu0 0
    %426 = vmatprep.mubr.bf16.mxu0 0
    %427 = vmatmul.mubr.bf16.gmra.mrb[0].mxu0 %v322
    %v428 = vpop.f32.mrb[0].mxu0
    %v429 = vadd.f32 %v344, %v428
    %v430 = vpop.f32.mrb[0].mxu0
    %v431 = vpop.f32.mrb[0].mxu0
    %v432 = vpop.f32.mrb[0].mxu0
    %433 = vdwg.mxu0
    %434 = vst [vmem:[#allocation15] sm:$0xff] %v429
    // Predicated region
    $region62: #{tpu_custom_call.1} parent=1 // pred_check
      _
    $region63: #{tpu_custom_call.1} parent=1 // pred_check_branch
      %436 = sbr.rel (0) target = $region65
    $region64: #{tpu_custom_call.1} parent=1 // pred_region
      %s438 = ssub.s32 128, 128
      %439 = vsyncadd [#allocation5], %s438
      %s441 = sshll.u32 [#allocation15], 4
      %s442 = int_to_ptr.vmem [resolvable:$true] %s441
      %444 = dma.vmem_to_hbm [thread:$0]  %s442, 128, %s7, [#allocation5]
    $region65: #{tpu_custom_call.1} parent=1 // pred_fallthru
      _
    // Predicated region
    $region66: #{tpu_custom_call.1} parent=1 // pred_check
      _
    $region67: #{tpu_custom_call.1} parent=1 // pred_check_branch
      %446 = sbr.rel (0) target = $region69
    $region68: #{tpu_custom_call.1} parent=1 // pred_region
      %447 = dma.done [#allocation5], 128
    $region69: #{tpu_custom_call.1} parent=1 // pred_fallthru
      _
    %448 = vsyncpa [#allocation4], 1
    %449 = vsyncpa [#allocation7], 1
    %450 = vsyncpa [#allocation10], 1
    %451 = vsyncpa [#allocation13], 1
    %452 = vsyncpa [#allocation5], 1

</llo_original>
